<compile_context>
chip_gen: v7x
topology: tpu7x:2x2x1
jax: 0.10.0
libtpu: 0.0.40
codegen_flags: <defaults>
</compile_context>

<pallas_src>
import functools

import jax
import jax.numpy as jnp
from jax.experimental import pallas as pl
from jax.experimental.pallas import tpu as pltpu

FEATURES = 341
FEATURES_PAD = 384          # 3 * 128 -> clean MXU K tiles
HIDDENS = 128
CLASSES = 4
BN_EPS = 1e-5

# Row offsets inside the single (896, 128) bf16 weight slab.
W1_OFF = 0
W2_OFF = FEATURES_PAD                  # 384
W3_OFF = W2_OFF + HIDDENS              # 512
W4_OFF = W3_OFF + HIDDENS              # 640
W5_OFF = W4_OFF + HIDDENS              # 768
W_SLAB_ROWS = W5_OFF + HIDDENS         # 896

# Row layout of the packed (9, 128) f32 vector-parameter slab:
#   rows 0..3 : BN gamma for layers 1..4
#   rows 4..7 : BN beta  for layers 1..4
#   row  8    : head bias b5 (zero-padded to 128 lanes)


def _bn_relu(y, gamma, beta):
    """Training-mode BatchNorm1d (batch stats, biased var) folded into one
    per-feature scale/shift, computed with a single-pass sum / sum-of-squares
    reduction (variance clamped at 0), followed by ReLU. All math in f32."""
    inv_n = 1.0 / y.shape[0]
    mu = jnp.sum(y, axis=0, keepdims=True) * inv_n
    ey2 = jnp.sum(y * y, axis=0, keepdims=True) * inv_n
    var = jnp.maximum(ey2 - mu * mu, 0.0)            # clamp: no NaN from cancellation
    scale = gamma * jax.lax.rsqrt(var + BN_EPS)       # (1, 128)
    shift = beta - mu * scale
    return jnp.maximum(y * scale + shift, 0.0)


def dnn_net_kernel(x_ref, w_ref, vec_ref, logits_ref, f1_ref, f2_ref, xpad_ref):
    vecs = vec_ref[...]                               # (9, 128) f32, one load

    def dot(h, w):                                    # bf16 x bf16 -> f32 on MXU
        return jnp.dot(h, w, preferred_element_type=jnp.float32)

    # ---- pad 341 -> 384 and narrow to bf16 inside the kernel (VMEM scratch) ----
    xpad_ref[...] = jnp.zeros_like(xpad_ref)
    xpad_ref[:, :FEATURES] = x_ref[...].astype(jnp.bfloat16)

    # ---- classifier1: two (Linear -> BN -> ReLU) blocks ----
    h = _bn_relu(dot(xpad_ref[...], w_ref[W1_OFF:W2_OFF, :]), vecs[0:1, :], vecs[4:5, :])
    h = _bn_relu(dot(h.astype(jnp.bfloat16), w_ref[W2_OFF:W3_OFF, :]), vecs[1:2, :], vecs[5:6, :])
    f1_ref[...] = h.astype(f1_ref.dtype)

    # ---- classifier2: two (Linear -> BN -> ReLU) blocks ----
    h = _bn_relu(dot(h.astype(jnp.bfloat16), w_ref[W3_OFF:W4_OFF, :]), vecs[2:3, :], vecs[6:7, :])
    h = _bn_relu(dot(h.astype(jnp.bfloat16), w_ref[W4_OFF:W5_OFF, :]), vecs[3:4, :], vecs[7:8, :])
    f2_ref[...] = h.astype(f2_ref.dtype)

    # ---- final head: matmul stays 128 lanes wide in VMEM, HBM gets only 4 ----
    y = dot(h.astype(jnp.bfloat16), w_ref[W5_OFF:W_SLAB_ROWS, :]) + vecs[8:9, :]
    logits_ref[...] = y[:, :CLASSES]


# ----------------------------------------------------------------------------
# Generation-aware VMEM budget
# ----------------------------------------------------------------------------
_VMEM_LIMIT_CACHE = []


def _get_vmem_limit_bytes():
    if not _VMEM_LIMIT_CACHE:
        try:
            cap = int(pltpu.get_tpu_info().vmem_capacity_bytes)
        except Exception:
            cap = 64 * 1024 * 1024            # conservative fallback (v7x per-TC)
        # ~1/8 headroom for compiler-managed scratch/spills; never ask for more
        # than 112 MiB even on 128 MiB (v5e/v6e) parts.  v7x (64 MiB) -> ~56 MiB.
        _VMEM_LIMIT_CACHE.append(int(min(cap - cap // 8, 112 * 1024 * 1024)))
    return _VMEM_LIMIT_CACHE[0]


# Rough per-row VMEM footprint (x f32 + padded bf16 copy + f1/f2/logits outputs
# + live f32 intermediates + slack for compiler scratch).
_EST_BYTES_PER_ROW = 6 * 1024
_EST_FIXED_BYTES = 2 * 1024 * 1024


# ----------------------------------------------------------------------------
# Forward wrapper
# ----------------------------------------------------------------------------
@functools.partial(jax.jit, static_argnames=("activations_dtype",))
def dnn_net_forward(x, kernel_params, activations_dtype=jnp.float32):
    """x: (batch, 341) f32.  The whole batch must stay VMEM-resident (required
    for batch-stat BN); the guard below enforces a generation-aware ceiling."""
    w_slab, vecs = kernel_params
    batch = x.shape[0]

    vmem_limit = _get_vmem_limit_bytes()
    est = batch * _EST_BYTES_PER_ROW + _EST_FIXED_BYTES
    if est > vmem_limit:
        # TODO(synk): add batch-streaming (pltpu.emit_pipeline over batch chunks
        # with a stats pass + normalize pass) and a v7x 2-TC split past this ceiling.
        raise ValueError(
            f"batch={batch} exceeds single-shot VMEM ceiling "
            f"(~{vmem_limit // _EST_BYTES_PER_ROW} rows on this TPU generation)")

    vmem = pl.BlockSpec(memory_space=pltpu.MemorySpace.VMEM)
    logits, f1, f2 = pl.pallas_call(
        dnn_net_kernel,
        out_shape=(
            jax.ShapeDtypeStruct((batch, CLASSES), jnp.float32),
            jax.ShapeDtypeStruct((batch, HIDDENS), activations_dtype),
            jax.ShapeDtypeStruct((batch, HIDDENS), activations_dtype),
        ),
        in_specs=[vmem, vmem, vmem],
        out_specs=(vmem, vmem, vmem),
        scratch_shapes=[pltpu.VMEM((batch, FEATURES_PAD), jnp.bfloat16)],
        compiler_params=pltpu.CompilerParams(vmem_limit_bytes=vmem_limit),
    )(x, w_slab, vecs)
    return logits, (f1, f2)


# ----------------------------------------------------------------------------
# Parameter construction / packing
# ----------------------------------------------------------------------------
def init_torch_params(key):
    """f32 PyTorch-style params: Linear ~ U(-1/sqrt(fan_in), +), BN gamma=1, beta=0."""
    layers = []
    dims = [(FEATURES, HIDDENS)] + [(HIDDENS, HIDDENS)] * 3
    for fan_in, fan_out in dims:
        key, kw, kb = jax.random.split(key, 3)
        bound = 1.0 / (fan_in ** 0.5)
        w = jax.random.uniform(kw, (fan_in, fan_out), jnp.float32, -bound, bound)
        b = jax.random.uniform(kb, (1, fan_out), jnp.float32, -bound, bound)
        layers.append((w, b,
                       jnp.ones((1, fan_out), jnp.float32),
                       jnp.zeros((1, fan_out), jnp.float32)))
    key, kw, kb = jax.random.split(key, 3)
    bound = 1.0 / (HIDDENS ** 0.5)
    w5 = jax.random.uniform(kw, (HIDDENS, CLASSES), jnp.float32, -bound, bound)
    b5 = jax.random.uniform(kb, (1, CLASSES), jnp.float32, -bound, bound)
    return layers, (w5, b5)


def pack_kernel_params(torch_params):
    """Coalesce / pad / narrow the PyTorch-style params into 2 kernel inputs:
    one (896, 128) bf16 weight slab and one (9, 128) f32 vector slab.
    Pre-BN biases b1..b4 are intentionally dropped: training-mode BatchNorm's
    mean subtraction cancels them exactly."""
    layers, (w5, b5) = torch_params
    (w1, _b1, g1, be1), (w2, _b2, g2, be2), (w3, _b3, g3, be3), (w4, _b4, g4, be4) = layers

    w1p = jnp.pad(w1, ((0, FEATURES_PAD - FEATURES), (0, 0)))          # (384, 128)
    w5p = jnp.pad(w5, ((0, 0), (0, HIDDENS - CLASSES)))                # (128, 128)
    w_slab = jnp.concatenate([w1p, w2, w3, w4, w5p], axis=0).astype(jnp.bfloat16)  # (896, 128)

    b5p = jnp.pad(b5, ((0, 0), (0, HIDDENS - CLASSES)))                # stays f32
    vecs = jnp.concatenate([g1, g2, g3, g4, be1, be2, be3, be4, b5p], axis=0)  # (9, 128)
    return (w_slab, vecs)


# ----------------------------------------------------------------------------
# References
# ----------------------------------------------------------------------------
def mirror_reference(x, kernel_params):
    """Pure-JAX mirror of the kernel math (same bf16 weights, no pre-BN biases)."""
    w_slab, vecs = kernel_params
    xb = jnp.pad(x, ((0, 0), (0, FEATURES_PAD - FEATURES))).astype(jnp.bfloat16)

    def dot(h, w):
        return jnp.dot(h.astype(jnp.bfloat16), w, preferred_element_type=jnp.float32)

    h = _bn_relu(dot(xb, w_slab[W1_OFF:W2_OFF]), vecs[0:1], vecs[4:5])
    f1 = _bn_relu(dot(h, w_slab[W2_OFF:W3_OFF]), vecs[1:2], vecs[5:6])
    h = _bn_relu(dot(f1, w_slab[W3_OFF:W4_OFF]), vecs[2:3], vecs[6:7])
    f2 = _bn_relu(dot(h, w_slab[W4_OFF:W5_OFF]), vecs[3:4], vecs[7:8])
    logits = dot(f2, w_slab[W5_OFF:W_SLAB_ROWS]) + vecs[8:9]
    return logits[:, :CLASSES], f1, f2


def faithful_reference(x, torch_params):
    """Full-precision f32 reference with the original PyTorch semantics
    (including the pre-BN Linear biases, which BN cancels)."""
    layers, (w5, b5) = torch_params

    def block(h, w, b, g, be):
        y = h @ w + b
        mu = jnp.mean(y, axis=0, keepdims=True)
        var = jnp.mean((y - mu) ** 2, axis=0, keepdims=True)
        return jnp.maximum((y - mu) / jnp.sqrt(var + BN_EPS) * g + be, 0.0)

    (w1, b1, g1, be1), (w2, b2, g2, be2), (w3, b3, g3, be3), (w4, b4, g4, be4) = layers
    h = block(x, w1, b1, g1, be1)
    f1 = block(h, w2, b2, g2, be2)
    h = block(f1, w3, b3, g3, be3)
    f2 = block(h, w4, b4, g4, be4)
    return f2 @ w5 + b5, f1, f2


if __name__ == "__main__":
    key = jax.random.PRNGKey(0)
    key, kx, kp = jax.random.split(key, 3)

    batch = 8
    x = jax.random.normal(kx, (batch, FEATURES), jnp.float32)

    torch_params = init_torch_params(kp)
    kernel_params = pack_kernel_params(torch_params)

    logits, (f1, f2) = dnn_net_forward(x, kernel_params)
    jax.block_until_ready((logits, f1, f2))

    assert logits.shape == (batch, CLASSES) and logits.dtype == jnp.float32
    assert f1.shape == (batch, HIDDENS) and f2.shape == (batch, HIDDENS)

    # (a) tight check vs. an exact mirror of the kernel math
    m_logits, m_f1, m_f2 = mirror_reference(x, kernel_params)
    assert jnp.allclose(logits, m_logits, atol=1e-4, rtol=1e-4)
    assert jnp.allclose(f1, m_f1, atol=1e-4, rtol=1e-4)
    assert jnp.allclose(f2, m_f2, atol=1e-4, rtol=1e-4)

    # (b) looser check vs. the f32 PyTorch-faithful reference (with pre-BN biases);
    #     the tolerance only absorbs the bf16 weight quantization.
    r_logits, r_f1, r_f2 = faithful_reference(x, torch_params)
    assert jnp.allclose(logits, r_logits, atol=5e-2, rtol=5e-2)
    assert jnp.allclose(f1, r_f1, atol=5e-2, rtol=5e-2)
    assert jnp.allclose(f2, r_f2, atol=5e-2, rtol=5e-2)

    # (c) optional reduced-writeback path: bf16 f1/f2 (halves the dominant HBM write)
    lb, (f1b, f2b) = dnn_net_forward(x, kernel_params, activations_dtype=jnp.bfloat16)
    jax.block_until_ready((lb, f1b, f2b))
    assert f1b.dtype == jnp.bfloat16 and f2b.dtype == jnp.bfloat16
    assert bool(jnp.isfinite(lb).all())

    print("KERNEL_OK")
</pallas_src>

<mosaic_0001>
module attributes {stable_mosaic.version = 11 : i64} {
  func.func @dnn_net_kernel(%arg0: memref<8x341xf32, #tpu.memory_space<vmem>>, %arg1: memref<896x128xbf16, #tpu.memory_space<vmem>>, %arg2: memref<9x128xf32, #tpu.memory_space<vmem>>, %arg3: memref<8x4xf32, #tpu.memory_space<vmem>>, %arg4: memref<8x128xf32, #tpu.memory_space<vmem>>, %arg5: memref<8x128xf32, #tpu.memory_space<vmem>>, %arg6: memref<8x384xbf16, #tpu.memory_space<vmem>>) attributes {dimension_semantics = [], scalar_prefetch = 0 : i64, scratch_operands = 1 : i64, tpu.core_type = #tpu.core_type<tc>} {
    %c0 = arith.constant 0 : index
    %c0_0 = arith.constant 0 : index
    %0 = vector.load %arg2[%c0, %c0_0] : memref<9x128xf32, #tpu.memory_space<vmem>>, vector<9x128xf32>
    %cst = arith.constant 0.000000e+00 : bf16
    %1 = vector.broadcast %cst : bf16 to vector<8x384xbf16>
    %c0_1 = arith.constant 0 : index
    %c0_2 = arith.constant 0 : index
    %2 = vector.load %arg6[%c0_1, %c0_2] : memref<8x384xbf16, #tpu.memory_space<vmem>>, vector<8x384xbf16>
    tpu.vector_store %arg6[%c0_1, %c0_2], %1 {strides = array<i32>} : memref<8x384xbf16, #tpu.memory_space<vmem>>, vector<8x384xbf16>,
    %c0_3 = arith.constant 0 : index
    %c0_4 = arith.constant 0 : index
    %3 = vector.load %arg0[%c0_3, %c0_4] : memref<8x341xf32, #tpu.memory_space<vmem>>, vector<8x341xf32>
    %4 = arith.truncf %3 : vector<8x341xf32> to vector<8x341xbf16>
    %c0_5 = arith.constant 0 : index
    %c0_6 = arith.constant 0 : index
    %5 = vector.load %arg6[%c0_5, %c0_6] : memref<8x384xbf16, #tpu.memory_space<vmem>>, vector<8x341xbf16>
    tpu.vector_store %arg6[%c0_5, %c0_6], %4 {strides = array<i32>} : memref<8x384xbf16, #tpu.memory_space<vmem>>, vector<8x341xbf16>,
    %c0_7 = arith.constant 0 : index
    %c0_8 = arith.constant 0 : index
    %6 = vector.load %arg6[%c0_7, %c0_8] : memref<8x384xbf16, #tpu.memory_space<vmem>>, vector<8x384xbf16>
    %c0_9 = arith.constant 0 : index
    %c0_10 = arith.constant 0 : index
    %7 = vector.load %arg1[%c0_9, %c0_10] : memref<896x128xbf16, #tpu.memory_space<vmem>>, vector<384x128xbf16>
    %cst_11 = arith.constant dense<0.000000e+00> : vector<8x128xf32>
    %8 = tpu.matmul %6, %7, %cst_11 {dimension_numbers = #tpu.dot_dimension_numbers<[1], [0], [0], [1], [0, 0, 1, 1], [], []>} : vector<8x384xbf16>, vector<384x128xbf16>, vector<8x128xf32> -> vector<8x128xf32>
    %9 = vector.extract_strided_slice %0 {offsets = [0, 0], sizes = [1, 128], strides = [1, 1]} : vector<9x128xf32> to vector<1x128xf32>
    %10 = vector.extract_strided_slice %0 {offsets = [4, 0], sizes = [1, 128], strides = [1, 1]} : vector<9x128xf32> to vector<1x128xf32>
    %cst_12 = arith.constant dense<0.000000e+00> : vector<128xf32>
    %11 = vector.multi_reduction <add>, %8, %cst_12 [0] : vector<8x128xf32> to vector<128xf32>
    %12 = vector.shape_cast %11 : vector<128xf32> to vector<1x128xf32>
    %cst_13 = arith.constant 1.250000e-01 : f32
    %13 = vector.broadcast %cst_13 : f32 to vector<1x128xf32>
    %14 = arith.mulf %12, %13 : vector<1x128xf32>
    %15 = arith.mulf %8, %8 : vector<8x128xf32>
    %cst_14 = arith.constant dense<0.000000e+00> : vector<128xf32>
    %16 = vector.multi_reduction <add>, %15, %cst_14 [0] : vector<8x128xf32> to vector<128xf32>
    %17 = vector.shape_cast %16 : vector<128xf32> to vector<1x128xf32>
    %cst_15 = arith.constant 1.250000e-01 : f32
    %18 = vector.broadcast %cst_15 : f32 to vector<1x128xf32>
    %19 = arith.mulf %17, %18 : vector<1x128xf32>
    %20 = arith.mulf %14, %14 : vector<1x128xf32>
    %21 = arith.subf %19, %20 : vector<1x128xf32>
    %cst_16 = arith.constant 0.000000e+00 : f32
    %22 = vector.broadcast %cst_16 : f32 to vector<1x128xf32>
    %23 = arith.maximumf %21, %22 : vector<1x128xf32>
    %cst_17 = arith.constant 9.99999974E-6 : f32
    %24 = vector.broadcast %cst_17 : f32 to vector<1x128xf32>
    %25 = arith.addf %23, %24 : vector<1x128xf32>
    %26 = math.rsqrt %25 : vector<1x128xf32>
    %27 = arith.mulf %9, %26 : vector<1x128xf32>
    %28 = arith.mulf %14, %27 : vector<1x128xf32>
    %29 = arith.subf %10, %28 : vector<1x128xf32>
    %30 = vector.broadcast %27 : vector<1x128xf32> to vector<8x128xf32>
    %31 = arith.mulf %8, %30 : vector<8x128xf32>
    %32 = vector.broadcast %29 : vector<1x128xf32> to vector<8x128xf32>
    %33 = arith.addf %31, %32 : vector<8x128xf32>
    %cst_18 = arith.constant 0.000000e+00 : f32
    %34 = vector.broadcast %cst_18 : f32 to vector<8x128xf32>
    %35 = arith.maximumf %33, %34 : vector<8x128xf32>
    %36 = arith.truncf %35 : vector<8x128xf32> to vector<8x128xbf16>
    %c384 = arith.constant 384 : index
    %c0_19 = arith.constant 0 : index
    %37 = vector.load %arg1[%c384, %c0_19] : memref<896x128xbf16, #tpu.memory_space<vmem>>, vector<128x128xbf16>
    %cst_20 = arith.constant dense<0.000000e+00> : vector<8x128xf32>
    %38 = tpu.matmul %36, %37, %cst_20 {dimension_numbers = #tpu.dot_dimension_numbers<[1], [0], [0], [1], [0, 0, 1, 1], [], []>} : vector<8x128xbf16>, vector<128x128xbf16>, vector<8x128xf32> -> vector<8x128xf32>
    %39 = vector.extract_strided_slice %0 {offsets = [1, 0], sizes = [1, 128], strides = [1, 1]} : vector<9x128xf32> to vector<1x128xf32>
    %40 = vector.extract_strided_slice %0 {offsets = [5, 0], sizes = [1, 128], strides = [1, 1]} : vector<9x128xf32> to vector<1x128xf32>
    %cst_21 = arith.constant dense<0.000000e+00> : vector<128xf32>
    %41 = vector.multi_reduction <add>, %38, %cst_21 [0] : vector<8x128xf32> to vector<128xf32>
    %42 = vector.shape_cast %41 : vector<128xf32> to vector<1x128xf32>
    %cst_22 = arith.constant 1.250000e-01 : f32
    %43 = vector.broadcast %cst_22 : f32 to vector<1x128xf32>
    %44 = arith.mulf %42, %43 : vector<1x128xf32>
    %45 = arith.mulf %38, %38 : vector<8x128xf32>
    %cst_23 = arith.constant dense<0.000000e+00> : vector<128xf32>
    %46 = vector.multi_reduction <add>, %45, %cst_23 [0] : vector<8x128xf32> to vector<128xf32>
    %47 = vector.shape_cast %46 : vector<128xf32> to vector<1x128xf32>
    %cst_24 = arith.constant 1.250000e-01 : f32
    %48 = vector.broadcast %cst_24 : f32 to vector<1x128xf32>
    %49 = arith.mulf %47, %48 : vector<1x128xf32>
    %50 = arith.mulf %44, %44 : vector<1x128xf32>
    %51 = arith.subf %49, %50 : vector<1x128xf32>
    %cst_25 = arith.constant 0.000000e+00 : f32
    %52 = vector.broadcast %cst_25 : f32 to vector<1x128xf32>
    %53 = arith.maximumf %51, %52 : vector<1x128xf32>
    %cst_26 = arith.constant 9.99999974E-6 : f32
    %54 = vector.broadcast %cst_26 : f32 to vector<1x128xf32>
    %55 = arith.addf %53, %54 : vector<1x128xf32>
    %56 = math.rsqrt %55 : vector<1x128xf32>
    %57 = arith.mulf %39, %56 : vector<1x128xf32>
    %58 = arith.mulf %44, %57 : vector<1x128xf32>
    %59 = arith.subf %40, %58 : vector<1x128xf32>
    %60 = vector.broadcast %57 : vector<1x128xf32> to vector<8x128xf32>
    %61 = arith.mulf %38, %60 : vector<8x128xf32>
    %62 = vector.broadcast %59 : vector<1x128xf32> to vector<8x128xf32>
    %63 = arith.addf %61, %62 : vector<8x128xf32>
    %cst_27 = arith.constant 0.000000e+00 : f32
    %64 = vector.broadcast %cst_27 : f32 to vector<8x128xf32>
    %65 = arith.maximumf %63, %64 : vector<8x128xf32>
    %c0_28 = arith.constant 0 : index
    %c0_29 = arith.constant 0 : index
    %66 = vector.load %arg4[%c0_28, %c0_29] : memref<8x128xf32, #tpu.memory_space<vmem>>, vector<8x128xf32>
    tpu.vector_store %arg4[%c0_28, %c0_29], %65 {strides = array<i32>} : memref<8x128xf32, #tpu.memory_space<vmem>>, vector<8x128xf32>,
    %67 = arith.truncf %65 : vector<8x128xf32> to vector<8x128xbf16>
    %c512 = arith.constant 512 : index
    %c0_30 = arith.constant 0 : index
    %68 = vector.load %arg1[%c512, %c0_30] : memref<896x128xbf16, #tpu.memory_space<vmem>>, vector<128x128xbf16>
    %cst_31 = arith.constant dense<0.000000e+00> : vector<8x128xf32>
    %69 = tpu.matmul %67, %68, %cst_31 {dimension_numbers = #tpu.dot_dimension_numbers<[1], [0], [0], [1], [0, 0, 1, 1], [], []>} : vector<8x128xbf16>, vector<128x128xbf16>, vector<8x128xf32> -> vector<8x128xf32>
    %70 = vector.extract_strided_slice %0 {offsets = [2, 0], sizes = [1, 128], strides = [1, 1]} : vector<9x128xf32> to vector<1x128xf32>
    %71 = vector.extract_strided_slice %0 {offsets = [6, 0], sizes = [1, 128], strides = [1, 1]} : vector<9x128xf32> to vector<1x128xf32>
    %cst_32 = arith.constant dense<0.000000e+00> : vector<128xf32>
    %72 = vector.multi_reduction <add>, %69, %cst_32 [0] : vector<8x128xf32> to vector<128xf32>
    %73 = vector.shape_cast %72 : vector<128xf32> to vector<1x128xf32>
    %cst_33 = arith.constant 1.250000e-01 : f32
    %74 = vector.broadcast %cst_33 : f32 to vector<1x128xf32>
    %75 = arith.mulf %73, %74 : vector<1x128xf32>
    %76 = arith.mulf %69, %69 : vector<8x128xf32>
    %cst_34 = arith.constant dense<0.000000e+00> : vector<128xf32>
    %77 = vector.multi_reduction <add>, %76, %cst_34 [0] : vector<8x128xf32> to vector<128xf32>
    %78 = vector.shape_cast %77 : vector<128xf32> to vector<1x128xf32>
    %cst_35 = arith.constant 1.250000e-01 : f32
    %79 = vector.broadcast %cst_35 : f32 to vector<1x128xf32>
    %80 = arith.mulf %78, %79 : vector<1x128xf32>
    %81 = arith.mulf %75, %75 : vector<1x128xf32>
    %82 = arith.subf %80, %81 : vector<1x128xf32>
    %cst_36 = arith.constant 0.000000e+00 : f32
    %83 = vector.broadcast %cst_36 : f32 to vector<1x128xf32>
    %84 = arith.maximumf %82, %83 : vector<1x128xf32>
    %cst_37 = arith.constant 9.99999974E-6 : f32
    %85 = vector.broadcast %cst_37 : f32 to vector<1x128xf32>
    %86 = arith.addf %84, %85 : vector<1x128xf32>
    %87 = math.rsqrt %86 : vector<1x128xf32>
    %88 = arith.mulf %70, %87 : vector<1x128xf32>
    %89 = arith.mulf %75, %88 : vector<1x128xf32>
    %90 = arith.subf %71, %89 : vector<1x128xf32>
    %91 = vector.broadcast %88 : vector<1x128xf32> to vector<8x128xf32>
    %92 = arith.mulf %69, %91 : vector<8x128xf32>
    %93 = vector.broadcast %90 : vector<1x128xf32> to vector<8x128xf32>
    %94 = arith.addf %92, %93 : vector<8x128xf32>
    %cst_38 = arith.constant 0.000000e+00 : f32
    %95 = vector.broadcast %cst_38 : f32 to vector<8x128xf32>
    %96 = arith.maximumf %94, %95 : vector<8x128xf32>
    %97 = arith.truncf %96 : vector<8x128xf32> to vector<8x128xbf16>
    %c640 = arith.constant 640 : index
    %c0_39 = arith.constant 0 : index
    %98 = vector.load %arg1[%c640, %c0_39] : memref<896x128xbf16, #tpu.memory_space<vmem>>, vector<128x128xbf16>
    %cst_40 = arith.constant dense<0.000000e+00> : vector<8x128xf32>
    %99 = tpu.matmul %97, %98, %cst_40 {dimension_numbers = #tpu.dot_dimension_numbers<[1], [0], [0], [1], [0, 0, 1, 1], [], []>} : vector<8x128xbf16>, vector<128x128xbf16>, vector<8x128xf32> -> vector<8x128xf32>
    %100 = vector.extract_strided_slice %0 {offsets = [3, 0], sizes = [1, 128], strides = [1, 1]} : vector<9x128xf32> to vector<1x128xf32>
    %101 = vector.extract_strided_slice %0 {offsets = [7, 0], sizes = [1, 128], strides = [1, 1]} : vector<9x128xf32> to vector<1x128xf32>
    %cst_41 = arith.constant dense<0.000000e+00> : vector<128xf32>
    %102 = vector.multi_reduction <add>, %99, %cst_41 [0] : vector<8x128xf32> to vector<128xf32>
    %103 = vector.shape_cast %102 : vector<128xf32> to vector<1x128xf32>
    %cst_42 = arith.constant 1.250000e-01 : f32
    %104 = vector.broadcast %cst_42 : f32 to vector<1x128xf32>
    %105 = arith.mulf %103, %104 : vector<1x128xf32>
    %106 = arith.mulf %99, %99 : vector<8x128xf32>
    %cst_43 = arith.constant dense<0.000000e+00> : vector<128xf32>
    %107 = vector.multi_reduction <add>, %106, %cst_43 [0] : vector<8x128xf32> to vector<128xf32>
    %108 = vector.shape_cast %107 : vector<128xf32> to vector<1x128xf32>
    %cst_44 = arith.constant 1.250000e-01 : f32
    %109 = vector.broadcast %cst_44 : f32 to vector<1x128xf32>
    %110 = arith.mulf %108, %109 : vector<1x128xf32>
    %111 = arith.mulf %105, %105 : vector<1x128xf32>
    %112 = arith.subf %110, %111 : vector<1x128xf32>
    %cst_45 = arith.constant 0.000000e+00 : f32
    %113 = vector.broadcast %cst_45 : f32 to vector<1x128xf32>
    %114 = arith.maximumf %112, %113 : vector<1x128xf32>
    %cst_46 = arith.constant 9.99999974E-6 : f32
    %115 = vector.broadcast %cst_46 : f32 to vector<1x128xf32>
    %116 = arith.addf %114, %115 : vector<1x128xf32>
    %117 = math.rsqrt %116 : vector<1x128xf32>
    %118 = arith.mulf %100, %117 : vector<1x128xf32>
    %119 = arith.mulf %105, %118 : vector<1x128xf32>
    %120 = arith.subf %101, %119 : vector<1x128xf32>
    %121 = vector.broadcast %118 : vector<1x128xf32> to vector<8x128xf32>
    %122 = arith.mulf %99, %121 : vector<8x128xf32>
    %123 = vector.broadcast %120 : vector<1x128xf32> to vector<8x128xf32>
    %124 = arith.addf %122, %123 : vector<8x128xf32>
    %cst_47 = arith.constant 0.000000e+00 : f32
    %125 = vector.broadcast %cst_47 : f32 to vector<8x128xf32>
    %126 = arith.maximumf %124, %125 : vector<8x128xf32>
    %c0_48 = arith.constant 0 : index
    %c0_49 = arith.constant 0 : index
    %127 = vector.load %arg5[%c0_48, %c0_49] : memref<8x128xf32, #tpu.memory_space<vmem>>, vector<8x128xf32>
    tpu.vector_store %arg5[%c0_48, %c0_49], %126 {strides = array<i32>} : memref<8x128xf32, #tpu.memory_space<vmem>>, vector<8x128xf32>,
    %128 = arith.truncf %126 : vector<8x128xf32> to vector<8x128xbf16>
    %c768 = arith.constant 768 : index
    %c0_50 = arith.constant 0 : index
    %129 = vector.load %arg1[%c768, %c0_50] : memref<896x128xbf16, #tpu.memory_space<vmem>>, vector<128x128xbf16>
    %cst_51 = arith.constant dense<0.000000e+00> : vector<8x128xf32>
    %130 = tpu.matmul %128, %129, %cst_51 {dimension_numbers = #tpu.dot_dimension_numbers<[1], [0], [0], [1], [0, 0, 1, 1], [], []>} : vector<8x128xbf16>, vector<128x128xbf16>, vector<8x128xf32> -> vector<8x128xf32>
    %131 = vector.extract_strided_slice %0 {offsets = [8, 0], sizes = [1, 128], strides = [1, 1]} : vector<9x128xf32> to vector<1x128xf32>
    %132 = vector.broadcast %131 : vector<1x128xf32> to vector<8x128xf32>
    %133 = arith.addf %130, %132 : vector<8x128xf32>
    %134 = vector.extract_strided_slice %133 {offsets = [0, 0], sizes = [8, 4], strides = [1, 1]} : vector<8x128xf32> to vector<8x4xf32>
    %c0_52 = arith.constant 0 : index
    %c0_53 = arith.constant 0 : index
    %135 = vector.load %arg3[%c0_52, %c0_53] : memref<8x4xf32, #tpu.memory_space<vmem>>, vector<8x4xf32>
    tpu.vector_store %arg3[%c0_52, %c0_53], %134 {strides = array<i32>} : memref<8x4xf32, #tpu.memory_space<vmem>>, vector<8x4xf32>,
    return
  }
}

</mosaic_0001>

<llo_original>
// kernel: dnn_net_forward.1
$region0: #{dnn_net_forward.1}
  #allocation0 [shape = 'u32[]', space=smem, size = 0x4, offset = 0x4, fixed_abs, tag = 'smem constant byte address 0x4 - core index']
  #allocation1 [shape = 'u32[144,128]{1,0:T(1,128)}', space=vmem, size = 0x12000, scoped, tag = 'internal scratch']
  #allocation2 [shape = 'bf16[8,384]{1,0:T(8,128)(2,1)}', space=vmem, size = 0x1800, scoped, tag = 'scratch operand']
  %s0 = inlined_call_operand.hbm [shape: f32[8,341], index: 0, kind: input, shape index: {}]
  %s1 = inlined_call_operand.hbm [shape: bf16[896,128], index: 1, kind: input, shape index: {}]
  %s2 = inlined_call_operand.hbm [shape: f32[9,128], index: 2, kind: input, shape index: {}]
  %s3 = inlined_call_operand.vmem [shape: f32[8,4], index: 3, kind: output, shape index: {0}]
  %s4 = inlined_call_operand.hbm [shape: f32[8,128], index: 4, kind: output, shape index: {1}]
  %s5 = inlined_call_operand.hbm [shape: f32[8,128], index: 5, kind: output, shape index: {2}]
  %6 = xla_tuple %s3, %s4, %s5
  %s7 = sld [smem:[#allocation0]]
  $region50: #{dnn_net_forward.1} parent=0
    _
  %s9 = ssub.s32 1, %s7
  %s10 = scalar_select 0, %s9, %s7
  $region1: #{dnn_net_forward.1} parent=0
    #allocation3 [shape = 'u8[12288]{0}', space=vmem, size = 0x3000, scoped, tag = 'input window, operand 0, single buffered']
    #allocation4 [shape = 's32[1]{0}', space=sflag, size = 0x4, scoped, tag = 'scoped memory for dnn_net_forward.1']
    #allocation5 [shape = 's32[1]{0}', space=sflag, size = 0x4, scoped, tag = 'scoped memory for dnn_net_forward.1']
    #allocation6 [shape = 'u8[229376]{0}', space=vmem, size = 0x38000, scoped, tag = 'input window, operand 1, single buffered']
    #allocation7 [shape = 's32[1]{0}', space=sflag, size = 0x4, scoped, tag = 'scoped memory for dnn_net_forward.1']
    #allocation8 [shape = 'u8[8192]{0}', space=vmem, size = 0x2000, scoped, tag = 'input window, operand 2, single buffered']
    #allocation9 [shape = 'u8[4096]{0}', space=vmem, size = 0x1000, scoped, tag = 'output window, operand 1, single buffered']
    #allocation10 [shape = 'u8[4096]{0}', space=vmem, size = 0x1000, scoped, tag = 'output window, operand 2, single buffered']
    #allocation11 [shape = 's32[1]{0}', space=sflag, size = 0x4, scoped, tag = 'scoped memory for dnn_net_forward.1']
    %11 = vsyncpa [#allocation4], 0
    %12 = vsyncpa [#allocation7], 0
    %13 = vsyncpa [#allocation5], 0
    %14 = vsyncpa [#allocation11], 0
    // Predicated region
    $region2: #{dnn_net_forward.1} parent=1 // pred_check
      _
    $region3: #{dnn_net_forward.1} parent=1 // pred_check_branch
      %16 = sbr.rel (0) target = $region5
    $region4: #{dnn_net_forward.1} parent=1 // pred_region
      %s18 = ssub.s32 384, 384
      %19 = vsyncadd [#allocation4], %s18
      %s21 = sshll.u32 [#allocation3], 4
      %s22 = int_to_ptr.vmem [resolvable:$true] %s21
      %24 = dma.hbm_to_vmem [thread:$0]  %s0, 384, %s22, [#allocation4]
    $region5: #{dnn_net_forward.1} parent=1 // pred_fallthru
      _
    // Predicated region
    $region6: #{dnn_net_forward.1} parent=1 // pred_check
      _
    $region7: #{dnn_net_forward.1} parent=1 // pred_check_branch
      %26 = sbr.rel (0) target = $region9
    $region8: #{dnn_net_forward.1} parent=1 // pred_region
      %s28 = ssub.s32 7168, 7168
      %29 = vsyncadd [#allocation7], %s28
      %s30 = sshll.u32 [#allocation6], 4
      %s31 = int_to_ptr.vmem [resolvable:$true] %s30
      %36 = dma.hbm_to_vmem [thread:$0]  %s1, 7168, %s31, [#allocation7], 64, 64, 4
    $region9: #{dnn_net_forward.1} parent=1 // pred_fallthru
      _
    // Predicated region
    $region10: #{dnn_net_forward.1} parent=1 // pred_check
      _
    $region11: #{dnn_net_forward.1} parent=1 // pred_check_branch
      %38 = sbr.rel (0) target = $region13
    $region12: #{dnn_net_forward.1} parent=1 // pred_region
      %s40 = ssub.s32 256, 256
      %41 = vsyncadd [#allocation7], %s40
      %s42 = sshll.u32 [#allocation8], 4
      %s43 = int_to_ptr.vmem [resolvable:$true] %s42
      %48 = dma.hbm_to_vmem [thread:$0]  %s2, 256, %s43, [#allocation7], 128, 128, 8
    $region13: #{dnn_net_forward.1} parent=1 // pred_fallthru
      _
    // Predicated region
    $region14: #{dnn_net_forward.1} parent=1 // pred_check
      _
    $region15: #{dnn_net_forward.1} parent=1 // pred_check_branch
      %50 = sbr.rel (0) target = $region17
    $region16: #{dnn_net_forward.1} parent=1 // pred_region
      %51 = dma.done [#allocation4], 384
    $region17: #{dnn_net_forward.1} parent=1 // pred_fallthru
      _
    // Predicated region
    $region18: #{dnn_net_forward.1} parent=1 // pred_check
      _
    $region19: #{dnn_net_forward.1} parent=1 // pred_check_branch
      %53 = sbr.rel (0) target = $region21
    $region20: #{dnn_net_forward.1} parent=1 // pred_region
      %54 = dma.done [#allocation7], 7168
    $region21: #{dnn_net_forward.1} parent=1 // pred_fallthru
      _
    // Predicated region
    $region22: #{dnn_net_forward.1} parent=1 // pred_check
      _
    $region23: #{dnn_net_forward.1} parent=1 // pred_check_branch
      %56 = sbr.rel (0) target = $region25
    $region24: #{dnn_net_forward.1} parent=1 // pred_region
      %57 = dma.done [#allocation7], 256
    $region25: #{dnn_net_forward.1} parent=1 // pred_fallthru
      _
    %v59 = vld [vmem:[#allocation8] sm:$0xff]
    %v60 = vld [vmem:[#allocation8 + $0x8] sm:$0x1]
    %61 = vst [vmem:[#allocation2] sm:$0xff] 0
    %62 = vst [vmem:[#allocation2 + $0x8] sm:$0xf] 0
    %v63 = vld [vmem:[#allocation3] sm:$0xff]
    %v64 = vld [vmem:[#allocation3 + $0x8] sm:$0xff]
    %v65 = vld [vmem:[#allocation3 + $0x10] sm:$0xff]
    %v66 = vpack.c.bf16 %v63, %v63
    %v67 = vpack.c.bf16 %v64, %v64
    %v68 = vpack.c.bf16 %v65, %v65
    %v72 = vunpack.c.l.b16 %v66
    %v73 = vunpack.c.l.b16 %v67
    %v74 = vunpack.c.l.b16 %v68
    %v75 = vpack.c.b16 %v73, %v72
    %v76 = vpack.c.b16 %v74, %v74
    %79 = vst [vmem:[#allocation2] sm:$0xff] %v75
    %vm80 = vcmask 691200
    %81 = vst.msk [vmem:[#allocation2 + $0x8] sm:$0xf] %vm80, %v76
    %v82 = vld [vmem:[#allocation2] sm:$0xff]
    %v83 = vld [vmem:[#allocation2 + $0x8] sm:$0xf]
    %v84 = vld [vmem:[#allocation6] sm:$0xf]
    %v85 = vld [vmem:[#allocation6 + $0x4] sm:$0xf]
    %v86 = vld [vmem:[#allocation6 + $0x8] sm:$0xf]
    %v87 = vld [vmem:[#allocation6 + $0xc] sm:$0xf]
    %v88 = vld [vmem:[#allocation6 + $0x10] sm:$0xf]
    %v89 = vld [vmem:[#allocation6 + $0x14] sm:$0xf]
    %v90 = vld [vmem:[#allocation6 + $0x18] sm:$0xf]
    %v91 = vld [vmem:[#allocation6 + $0x1c] sm:$0xf]
    %v92 = vld [vmem:[#allocation6 + $0x20] sm:$0xf]
    %v93 = vld [vmem:[#allocation6 + $0x24] sm:$0xf]
    %v94 = vld [vmem:[#allocation6 + $0x28] sm:$0xf]
    %v95 = vld [vmem:[#allocation6 + $0x2c] sm:$0xf]
    %v96 = vld [vmem:[#allocation6 + $0x30] sm:$0xf]
    %v97 = vld [vmem:[#allocation6 + $0x34] sm:$0xf]
    %v98 = vld [vmem:[#allocation6 + $0x38] sm:$0xf]
    %v99 = vld [vmem:[#allocation6 + $0x3c] sm:$0xf]
    %v100 = vld [vmem:[#allocation6 + $0x40] sm:$0xf]
    %v101 = vld [vmem:[#allocation6 + $0x44] sm:$0xf]
    %v102 = vld [vmem:[#allocation6 + $0x48] sm:$0xf]
    %v103 = vld [vmem:[#allocation6 + $0x4c] sm:$0xf]
    %v104 = vld [vmem:[#allocation6 + $0x50] sm:$0xf]
    %v105 = vld [vmem:[#allocation6 + $0x54] sm:$0xf]
    %v106 = vld [vmem:[#allocation6 + $0x58] sm:$0xf]
    %v107 = vld [vmem:[#allocation6 + $0x5c] sm:$0xf]
    %v108 = vld [vmem:[#allocation6 + $0x60] sm:$0xf]
    %v109 = vld [vmem:[#allocation6 + $0x64] sm:$0xf]
    %v110 = vld [vmem:[#allocation6 + $0x68] sm:$0xf]
    %v111 = vld [vmem:[#allocation6 + $0x6c] sm:$0xf]
    %v112 = vld [vmem:[#allocation6 + $0x70] sm:$0xf]
    %v113 = vld [vmem:[#allocation6 + $0x74] sm:$0xf]
    %v114 = vld [vmem:[#allocation6 + $0x78] sm:$0xf]
    %v115 = vld [vmem:[#allocation6 + $0x7c] sm:$0xf]
    %v116 = vld [vmem:[#allocation6 + $0x80] sm:$0xf]
    %v117 = vld [vmem:[#allocation6 + $0x84] sm:$0xf]
    %v118 = vld [vmem:[#allocation6 + $0x88] sm:$0xf]
    %v119 = vld [vmem:[#allocation6 + $0x8c] sm:$0xf]
    %v120 = vld [vmem:[#allocation6 + $0x90] sm:$0xf]
    %v121 = vld [vmem:[#allocation6 + $0x94] sm:$0xf]
    %v122 = vld [vmem:[#allocation6 + $0x98] sm:$0xf]
    %v123 = vld [vmem:[#allocation6 + $0x9c] sm:$0xf]
    %v124 = vld [vmem:[#allocation6 + $0xa0] sm:$0xf]
    %v125 = vld [vmem:[#allocation6 + $0xa4] sm:$0xf]
    %v126 = vld [vmem:[#allocation6 + $0xa8] sm:$0xf]
    %v127 = vld [vmem:[#allocation6 + $0xac] sm:$0xf]
    %v128 = vld [vmem:[#allocation6 + $0xb0] sm:$0xf]
    %v129 = vld [vmem:[#allocation6 + $0xb4] sm:$0xf]
    %v130 = vld [vmem:[#allocation6 + $0xb8] sm:$0xf]
    %v131 = vld [vmem:[#allocation6 + $0xbc] sm:$0xf]
    %v134 = vunpack.c.l.b16 %v82
    %v135 = vunpack.c.h.b16 %v82
    %v136 = vunpack.c.l.b16 %v83
    %v137 = vpack.c.b16 %v134, %v134
    %v138 = vpack.c.b16 %v135, %v135
    %v139 = vpack.c.b16 %v136, %v136
    %v191 = vunpack.c.l.b16 %v84
    %v192 = vunpack.c.l.b16 %v85
    %v193 = vunpack.c.l.b16 %v86
    %v194 = vunpack.c.l.b16 %v87
    %v195 = vunpack.c.l.b16 %v88
    %v196 = vunpack.c.l.b16 %v89
    %v197 = vunpack.c.l.b16 %v90
    %v198 = vunpack.c.l.b16 %v91
    %v199 = vunpack.c.l.b16 %v92
    %v200 = vunpack.c.l.b16 %v93
    %v201 = vunpack.c.l.b16 %v94
    %v202 = vunpack.c.l.b16 %v95
    %v203 = vunpack.c.l.b16 %v96
    %v204 = vunpack.c.l.b16 %v97
    %v205 = vunpack.c.l.b16 %v98
    %v206 = vunpack.c.l.b16 %v99
    %v207 = vunpack.c.l.b16 %v100
    %v208 = vunpack.c.l.b16 %v101
    %v209 = vunpack.c.l.b16 %v102
    %v210 = vunpack.c.l.b16 %v103
    %v211 = vunpack.c.l.b16 %v104
    %v212 = vunpack.c.l.b16 %v105
    %v213 = vunpack.c.l.b16 %v106
    %v214 = vunpack.c.l.b16 %v107
    %v215 = vunpack.c.l.b16 %v108
    %v216 = vunpack.c.l.b16 %v109
    %v217 = vunpack.c.l.b16 %v110
    %v218 = vunpack.c.l.b16 %v111
    %v219 = vunpack.c.l.b16 %v112
    %v220 = vunpack.c.l.b16 %v113
    %v221 = vunpack.c.l.b16 %v114
    %v222 = vunpack.c.l.b16 %v115
    %v223 = vunpack.c.l.b16 %v116
    %v224 = vunpack.c.l.b16 %v117
    %v225 = vunpack.c.l.b16 %v118
    %v226 = vunpack.c.l.b16 %v119
    %v227 = vunpack.c.l.b16 %v120
    %v228 = vunpack.c.l.b16 %v121
    %v229 = vunpack.c.l.b16 %v122
    %v230 = vunpack.c.l.b16 %v123
    %v231 = vunpack.c.l.b16 %v124
    %v232 = vunpack.c.l.b16 %v125
    %v233 = vunpack.c.l.b16 %v126
    %v234 = vunpack.c.l.b16 %v127
    %v235 = vunpack.c.l.b16 %v128
    %v236 = vunpack.c.l.b16 %v129
    %v237 = vunpack.c.l.b16 %v130
    %v238 = vunpack.c.l.b16 %v131
    %v239 = vpack.c.b16 %v192, %v191
    %v240 = vpack.c.b16 %v194, %v193
    %v241 = vpack.c.b16 %v196, %v195
    %v242 = vpack.c.b16 %v198, %v197
    %v243 = vpack.c.b16 %v200, %v199
    %v244 = vpack.c.b16 %v202, %v201
    %v245 = vpack.c.b16 %v204, %v203
    %v246 = vpack.c.b16 %v206, %v205
    %v247 = vpack.c.b16 %v208, %v207
    %v248 = vpack.c.b16 %v210, %v209
    %v249 = vpack.c.b16 %v212, %v211
    %v250 = vpack.c.b16 %v214, %v213
    %v251 = vpack.c.b16 %v216, %v215
    %v252 = vpack.c.b16 %v218, %v217
    %v253 = vpack.c.b16 %v220, %v219
    %v254 = vpack.c.b16 %v222, %v221
    %v255 = vpack.c.b16 %v224, %v223
    %v256 = vpack.c.b16 %v226, %v225
    %v257 = vpack.c.b16 %v228, %v227
    %v258 = vpack.c.b16 %v230, %v229
    %v259 = vpack.c.b16 %v232, %v231
    %v260 = vpack.c.b16 %v234, %v233
    %v261 = vpack.c.b16 %v236, %v235
    %v262 = vpack.c.b16 %v238, %v237
    %287 = vmatprep.subr.bf16.mxu0 0
    %288 = vmatpush1.bf16.msra.mxu0 %v239
    %289 = vmatprep.subr.bf16.mxu0 0
    %290 = vmatpush1.bf16.msra.mxu0 %v240
    %291 = vmatprep.subr.bf16.mxu0 0
    %292 = vmatpush1.bf16.msra.mxu0 %v241
    %293 = vmatprep.subr.bf16.mxu0 0
    %294 = vmatpush1.bf16.msra.mxu0 %v242
    %295 = vmatprep.subr.bf16.mxu0 0
    %296 = vmatpush1.bf16.msra.mxu0 %v243
    %297 = vmatprep.subr.bf16.mxu0 0
    %298 = vmatpush1.bf16.msra.mxu0 %v244
    %299 = vmatprep.subr.bf16.mxu0 0
    %300 = vmatpush1.bf16.msra.mxu0 %v245
    %301 = vmatprep.subr.bf16.mxu0 0
    %302 = vmatpush1.bf16.msra.mxu0 %v246
    %303 = vmatprep.subr.bf16.mxu0 0
    %304 = vmatpush1.bf16.msra.mxu0 %v247
    %305 = vmatprep.subr.bf16.mxu0 0
    %306 = vmatpush1.bf16.msra.mxu0 %v248
    %307 = vmatprep.subr.bf16.mxu0 0
    %308 = vmatpush1.bf16.msra.mxu0 %v249
    %309 = vmatprep.subr.bf16.mxu0 0
    %310 = vmatpush1.bf16.msra.mxu0 %v250
    %311 = vmatprep.subr.bf16.mxu0 0
    %312 = vmatpush1.bf16.msra.mxu0 %v251
    %313 = vmatprep.subr.bf16.mxu0 0
    %314 = vmatpush1.bf16.msra.mxu0 %v252
    %315 = vmatprep.subr.bf16.mxu0 0
    %316 = vmatpush1.bf16.msra.mxu0 %v253
    %317 = vmatprep.subr.bf16.mxu0 0
    %318 = vmatpush1.bf16.msra.mxu0 %v254
    %319 = vmatprep.mubr.bf16.mxu0 %v138
    %320 = vmatmul.mubr.bf16.gmra.mrb[0].mxu0 %v137
    %v321 = vpop.f32.mrb[0].mxu0
    %v322 = vadd.f32 0.0, %v321
    %v323 = vpop.f32.mrb[0].mxu0
    %v324 = vpop.f32.mrb[0].mxu0
    %v325 = vpop.f32.mrb[0].mxu0
    %326 = vdwg.mxu0
    %327 = vmatprep.subr.bf16.mxu0 0
    %328 = vmatpush1.bf16.msra.mxu0 %v255
    %329 = vmatprep.subr.bf16.mxu0 0
    %330 = vmatpush1.bf16.msra.mxu0 %v256
    %331 = vmatprep.subr.bf16.mxu0 0
    %332 = vmatpush1.bf16.msra.mxu0 %v257
    %333 = vmatprep.subr.bf16.mxu0 0
    %334 = vmatpush1.bf16.msra.mxu0 %v258
    %335 = vmatprep.subr.bf16.mxu0 0
    %336 = vmatpush1.bf16.msra.mxu0 %v259
    %337 = vmatprep.subr.bf16.mxu0 0
    %338 = vmatpush1.bf16.msra.mxu0 %v260
    %339 = vmatprep.subr.bf16.mxu0 0
    %340 = vmatpush1.bf16.msra.mxu0 %v261
    %341 = vmatprep.subr.bf16.mxu0 0
    %342 = vmatpush1.bf16.msra.mxu0 %v262
    %343 = vmatprep.subr.bf16.mxu0 0
    %344 = vmatpush1.bf16.msra.mxu0 0
    %345 = vmatprep.subr.bf16.mxu0 0
    %346 = vmatpush1.bf16.msra.mxu0 0
    %347 = vmatprep.subr.bf16.mxu0 0
    %348 = vmatpush1.bf16.msra.mxu0 0
    %349 = vmatprep.subr.bf16.mxu0 0
    %350 = vmatpush1.bf16.msra.mxu0 0
    %351 = vmatprep.subr.bf16.mxu0 0
    %352 = vmatpush1.bf16.msra.mxu0 0
    %353 = vmatprep.subr.bf16.mxu0 0
    %354 = vmatpush1.bf16.msra.mxu0 0
    %355 = vmatprep.subr.bf16.mxu0 0
    %356 = vmatpush1.bf16.msra.mxu0 0
    %357 = vmatprep.subr.bf16.mxu0 0
    %358 = vmatpush1.bf16.msra.mxu0 0
    %359 = vmatprep.mubr.bf16.mxu0 0
    %360 = vmatmul.mubr.bf16.gmra.mrb[0].mxu0 %v139
    %v361 = vpop.f32.mrb[0].mxu0
    %v362 = vadd.f32 %v322, %v361
    %v363 = vpop.f32.mrb[0].mxu0
    %v364 = vpop.f32.mrb[0].mxu0
    %v365 = vpop.f32.mrb[0].mxu0
    %366 = vdwg.mxu0
    %v367 = vrot.slane %v362, 4
    %v368 = vadd.f32 %v362, %v367
    %v369 = vrot.slane %v368, 2
    %v370 = vadd.f32 %v368, %v369
    %v371 = vrot.slane %v370, 1
    %v372 = vadd.f32 %v370, %v371
    %v373 = vmul.f32 %v372, 0.125
    %v374 = vmul.f32 %v362, %v362
    %v375 = vrot.slane %v374, 4
    %v376 = vadd.f32 %v374, %v375
    %v377 = vrot.slane %v376, 2
    %v378 = vadd.f32 %v376, %v377
    %v379 = vrot.slane %v378, 1
    %v380 = vadd.f32 %v378, %v379
    %v381 = vmul.f32 %v380, 0.125
    %v382 = vmul.f32 %v373, %v373
    %v383 = vsub.f32 %v381, %v382
    %v384 = vmax.f32 %v383, 0.0
    %v385 = vadd.f32 %v384, 1e-05
    %v386 = vrsqrt.pop %v385
    %v387 = vmul.f32 %v59, %v386
    %v388 = vmul.f32 %v373, %v387
    %v390 = vrot.slane %v388, 4
    %v392 = vsub.f32 %v59, %v390
    %v393 = vlaneseq
    %v394 = vshrl.u32 %v393, 7
    %v395 = vsub.s32 0, %v394
    %v396 = vrot.slane %v387, %v395
    %v397 = vmul.f32 %v362, %v396
    %v398 = vlaneseq
    %v399 = vshrl.u32 %v398, 7
    %v400 = vsub.s32 4, %v399
    %v401 = vrot.slane %v392, %v400
    %v402 = vadd.f32 %v397, %v401
    %v403 = vmax.f32 %v402, 0.0
    %v404 = vpack.c.bf16 %v403, %v403
    %v405 = vld [vmem:[#allocation6 + $0xc0] sm:$0xf]
    %v406 = vld [vmem:[#allocation6 + $0xc4] sm:$0xf]
    %v407 = vld [vmem:[#allocation6 + $0xc8] sm:$0xf]
    %v408 = vld [vmem:[#allocation6 + $0xcc] sm:$0xf]
    %v409 = vld [vmem:[#allocation6 + $0xd0] sm:$0xf]
    %v410 = vld [vmem:[#allocation6 + $0xd4] sm:$0xf]
    %v411 = vld [vmem:[#allocation6 + $0xd8] sm:$0xf]
    %v412 = vld [vmem:[#allocation6 + $0xdc] sm:$0xf]
    %v413 = vld [vmem:[#allocation6 + $0xe0] sm:$0xf]
    %v414 = vld [vmem:[#allocation6 + $0xe4] sm:$0xf]
    %v415 = vld [vmem:[#allocation6 + $0xe8] sm:$0xf]
    %v416 = vld [vmem:[#allocation6 + $0xec] sm:$0xf]
    %v417 = vld [vmem:[#allocation6 + $0xf0] sm:$0xf]
    %v418 = vld [vmem:[#allocation6 + $0xf4] sm:$0xf]
    %v419 = vld [vmem:[#allocation6 + $0xf8] sm:$0xf]
    %v420 = vld [vmem:[#allocation6 + $0xfc] sm:$0xf]
    %v437 = vunpack.c.l.b16 %v405
    %v438 = vunpack.c.l.b16 %v406
    %v439 = vunpack.c.l.b16 %v407
    %v440 = vunpack.c.l.b16 %v408
    %v441 = vunpack.c.l.b16 %v409
    %v442 = vunpack.c.l.b16 %v410
    %v443 = vunpack.c.l.b16 %v411
    %v444 = vunpack.c.l.b16 %v412
    %v445 = vunpack.c.l.b16 %v413
    %v446 = vunpack.c.l.b16 %v414
    %v447 = vunpack.c.l.b16 %v415
    %v448 = vunpack.c.l.b16 %v416
    %v449 = vunpack.c.l.b16 %v417
    %v450 = vunpack.c.l.b16 %v418
    %v451 = vunpack.c.l.b16 %v419
    %v452 = vunpack.c.l.b16 %v420
    %v453 = vpack.c.b16 %v438, %v437
    %v454 = vpack.c.b16 %v440, %v439
    %v455 = vpack.c.b16 %v442, %v441
    %v456 = vpack.c.b16 %v444, %v443
    %v457 = vpack.c.b16 %v446, %v445
    %v458 = vpack.c.b16 %v448, %v447
    %v459 = vpack.c.b16 %v450, %v449
    %v460 = vpack.c.b16 %v452, %v451
    %469 = vmatprep.subr.bf16.mxu0 0
    %470 = vmatpush1.bf16.msra.mxu0 %v453
    %471 = vmatprep.subr.bf16.mxu0 0
    %472 = vmatpush1.bf16.msra.mxu0 %v454
    %473 = vmatprep.subr.bf16.mxu0 0
    %474 = vmatpush1.bf16.msra.mxu0 %v455
    %475 = vmatprep.subr.bf16.mxu0 0
    %476 = vmatpush1.bf16.msra.mxu0 %v456
    %477 = vmatprep.subr.bf16.mxu0 0
    %478 = vmatpush1.bf16.msra.mxu0 %v457
    %479 = vmatprep.subr.bf16.mxu0 0
    %480 = vmatpush1.bf16.msra.mxu0 %v458
    %481 = vmatprep.subr.bf16.mxu0 0
    %482 = vmatpush1.bf16.msra.mxu0 %v459
    %483 = vmatprep.subr.bf16.mxu0 0
    %484 = vmatpush1.bf16.msra.mxu0 %v460
    %485 = vmatprep.subr.bf16.mxu0 0
    %486 = vmatpush1.bf16.msra.mxu0 0
    %487 = vmatprep.subr.bf16.mxu0 0
    %488 = vmatpush1.bf16.msra.mxu0 0
    %489 = vmatprep.subr.bf16.mxu0 0
    %490 = vmatpush1.bf16.msra.mxu0 0
    %491 = vmatprep.subr.bf16.mxu0 0
    %492 = vmatpush1.bf16.msra.mxu0 0
    %493 = vmatprep.subr.bf16.mxu0 0
    %494 = vmatpush1.bf16.msra.mxu0 0
    %495 = vmatprep.subr.bf16.mxu0 0
    %496 = vmatpush1.bf16.msra.mxu0 0
    %497 = vmatprep.subr.bf16.mxu0 0
    %498 = vmatpush1.bf16.msra.mxu0 0
    %499 = vmatprep.subr.bf16.mxu0 0
    %500 = vmatpush1.bf16.msra.mxu0 0
    %501 = vmatprep.mubr.bf16.mxu0 0
    %502 = vmatmul.mubr.bf16.gmra.mrb[0].mxu0 %v404
    %v503 = vpop.f32.mrb[0].mxu0
    %v504 = vadd.f32 0.0, %v503
    %v505 = vpop.f32.mrb[0].mxu0
    %v506 = vpop.f32.mrb[0].mxu0
    %v507 = vpop.f32.mrb[0].mxu0
    %508 = vdwg.mxu0
    %v509 = vrot.slane %v504, 4
    %v510 = vadd.f32 %v504, %v509
    %v511 = vrot.slane %v510, 2
    %v512 = vadd.f32 %v510, %v511
    %v513 = vrot.slane %v512, 1
    %v514 = vadd.f32 %v512, %v513
    %v515 = vmul.f32 %v514, 0.125
    %v516 = vmul.f32 %v504, %v504
    %v517 = vrot.slane %v516, 4
    %v518 = vadd.f32 %v516, %v517
    %v519 = vrot.slane %v518, 2
    %v520 = vadd.f32 %v518, %v519
    %v521 = vrot.slane %v520, 1
    %v522 = vadd.f32 %v520, %v521
    %v523 = vmul.f32 %v522, 0.125
    %v524 = vmul.f32 %v515, %v515
    %v525 = vsub.f32 %v523, %v524
    %v526 = vmax.f32 %v525, 0.0
    %v527 = vadd.f32 %v526, 1e-05
    %v528 = vrsqrt.pop %v527
    %v529 = vmul.f32 %v59, %v528
    %v530 = vmul.f32 %v515, %v529
    %v532 = vrot.slane %v530, 4
    %v534 = vsub.f32 %v59, %v532
    %v535 = vlaneseq
    %v536 = vshrl.u32 %v535, 7
    %v537 = vsub.s32 1, %v536
    %v538 = vrot.slane %v529, %v537
    %v539 = vmul.f32 %v504, %v538
    %v540 = vlaneseq
    %v541 = vshrl.u32 %v540, 7
    %v542 = vsub.s32 5, %v541
    %v543 = vrot.slane %v534, %v542
    %v544 = vadd.f32 %v539, %v543
    %v545 = vmax.f32 %v544, 0.0
    %546 = vst [vmem:[#allocation9] sm:$0xff] %v545
    %v547 = vpack.c.bf16 %v545, %v545
    %v548 = vld [vmem:[#allocation6 + $0x100] sm:$0xf]
    %v549 = vld [vmem:[#allocation6 + $0x104] sm:$0xf]
    %v550 = vld [vmem:[#allocation6 + $0x108] sm:$0xf]
    %v551 = vld [vmem:[#allocation6 + $0x10c] sm:$0xf]
    %v552 = vld [vmem:[#allocation6 + $0x110] sm:$0xf]
    %v553 = vld [vmem:[#allocation6 + $0x114] sm:$0xf]
    %v554 = vld [vmem:[#allocation6 + $0x118] sm:$0xf]
    %v555 = vld [vmem:[#allocation6 + $0x11c] sm:$0xf]
    %v556 = vld [vmem:[#allocation6 + $0x120] sm:$0xf]
    %v557 = vld [vmem:[#allocation6 + $0x124] sm:$0xf]
    %v558 = vld [vmem:[#allocation6 + $0x128] sm:$0xf]
    %v559 = vld [vmem:[#allocation6 + $0x12c] sm:$0xf]
    %v560 = vld [vmem:[#allocation6 + $0x130] sm:$0xf]
    %v561 = vld [vmem:[#allocation6 + $0x134] sm:$0xf]
    %v562 = vld [vmem:[#allocation6 + $0x138] sm:$0xf]
    %v563 = vld [vmem:[#allocation6 + $0x13c] sm:$0xf]
    %v580 = vunpack.c.l.b16 %v548
    %v581 = vunpack.c.l.b16 %v549
    %v582 = vunpack.c.l.b16 %v550
    %v583 = vunpack.c.l.b16 %v551
    %v584 = vunpack.c.l.b16 %v552
    %v585 = vunpack.c.l.b16 %v553
    %v586 = vunpack.c.l.b16 %v554
    %v587 = vunpack.c.l.b16 %v555
    %v588 = vunpack.c.l.b16 %v556
    %v589 = vunpack.c.l.b16 %v557
    %v590 = vunpack.c.l.b16 %v558
    %v591 = vunpack.c.l.b16 %v559
    %v592 = vunpack.c.l.b16 %v560
    %v593 = vunpack.c.l.b16 %v561
    %v594 = vunpack.c.l.b16 %v562
    %v595 = vunpack.c.l.b16 %v563
    %v596 = vpack.c.b16 %v581, %v580
    %v597 = vpack.c.b16 %v583, %v582
    %v598 = vpack.c.b16 %v585, %v584
    %v599 = vpack.c.b16 %v587, %v586
    %v600 = vpack.c.b16 %v589, %v588
    %v601 = vpack.c.b16 %v591, %v590
    %v602 = vpack.c.b16 %v593, %v592
    %v603 = vpack.c.b16 %v595, %v594
    %612 = vmatprep.subr.bf16.mxu0 0
    %613 = vmatpush1.bf16.msra.mxu0 %v596
    %614 = vmatprep.subr.bf16.mxu0 0
    %615 = vmatpush1.bf16.msra.mxu0 %v597
    %616 = vmatprep.subr.bf16.mxu0 0
    %617 = vmatpush1.bf16.msra.mxu0 %v598
    %618 = vmatprep.subr.bf16.mxu0 0
    %619 = vmatpush1.bf16.msra.mxu0 %v599
    %620 = vmatprep.subr.bf16.mxu0 0
    %621 = vmatpush1.bf16.msra.mxu0 %v600
    %622 = vmatprep.subr.bf16.mxu0 0
    %623 = vmatpush1.bf16.msra.mxu0 %v601
    %624 = vmatprep.subr.bf16.mxu0 0
    %625 = vmatpush1.bf16.msra.mxu0 %v602
    %626 = vmatprep.subr.bf16.mxu0 0
    %627 = vmatpush1.bf16.msra.mxu0 %v603
    %628 = vmatprep.subr.bf16.mxu0 0
    %629 = vmatpush1.bf16.msra.mxu0 0
    %630 = vmatprep.subr.bf16.mxu0 0
    %631 = vmatpush1.bf16.msra.mxu0 0
    %632 = vmatprep.subr.bf16.mxu0 0
    %633 = vmatpush1.bf16.msra.mxu0 0
    %634 = vmatprep.subr.bf16.mxu0 0
    %635 = vmatpush1.bf16.msra.mxu0 0
    %636 = vmatprep.subr.bf16.mxu0 0
    %637 = vmatpush1.bf16.msra.mxu0 0
    %638 = vmatprep.subr.bf16.mxu0 0
    %639 = vmatpush1.bf16.msra.mxu0 0
    %640 = vmatprep.subr.bf16.mxu0 0
    %641 = vmatpush1.bf16.msra.mxu0 0
    %642 = vmatprep.subr.bf16.mxu0 0
    %643 = vmatpush1.bf16.msra.mxu0 0
    %644 = vmatprep.mubr.bf16.mxu0 0
    %645 = vmatmul.mubr.bf16.gmra.mrb[0].mxu0 %v547
    %v646 = vpop.f32.mrb[0].mxu0
    %v647 = vadd.f32 0.0, %v646
    %v648 = vpop.f32.mrb[0].mxu0
    %v649 = vpop.f32.mrb[0].mxu0
    %v650 = vpop.f32.mrb[0].mxu0
    %651 = vdwg.mxu0
    %v652 = vrot.slane %v647, 4
    %v653 = vadd.f32 %v647, %v652
    %v654 = vrot.slane %v653, 2
    %v655 = vadd.f32 %v653, %v654
    %v656 = vrot.slane %v655, 1
    %v657 = vadd.f32 %v655, %v656
    %v658 = vmul.f32 %v657, 0.125
    %v659 = vmul.f32 %v647, %v647
    %v660 = vrot.slane %v659, 4
    %v661 = vadd.f32 %v659, %v660
    %v662 = vrot.slane %v661, 2
    %v663 = vadd.f32 %v661, %v662
    %v664 = vrot.slane %v663, 1
    %v665 = vadd.f32 %v663, %v664
    %v666 = vmul.f32 %v665, 0.125
    %v667 = vmul.f32 %v658, %v658
    %v668 = vsub.f32 %v666, %v667
    %v669 = vmax.f32 %v668, 0.0
    %v670 = vadd.f32 %v669, 1e-05
    %v671 = vrsqrt.pop %v670
    %v672 = vmul.f32 %v59, %v671
    %v673 = vmul.f32 %v658, %v672
    %v675 = vrot.slane %v673, 4
    %v677 = vsub.f32 %v59, %v675
    %v678 = vlaneseq
    %v679 = vshrl.u32 %v678, 7
    %v680 = vsub.s32 2, %v679
    %v681 = vrot.slane %v672, %v680
    %v682 = vmul.f32 %v647, %v681
    %v683 = vlaneseq
    %v684 = vshrl.u32 %v683, 7
    %v685 = vsub.s32 6, %v684
    %v686 = vrot.slane %v677, %v685
    %v687 = vadd.f32 %v682, %v686
    %v688 = vmax.f32 %v687, 0.0
    %v689 = vpack.c.bf16 %v688, %v688
    %v690 = vld [vmem:[#allocation6 + $0x140] sm:$0xf]
    %v691 = vld [vmem:[#allocation6 + $0x144] sm:$0xf]
    %v692 = vld [vmem:[#allocation6 + $0x148] sm:$0xf]
    %v693 = vld [vmem:[#allocation6 + $0x14c] sm:$0xf]
    %v694 = vld [vmem:[#allocation6 + $0x150] sm:$0xf]
    %v695 = vld [vmem:[#allocation6 + $0x154] sm:$0xf]
    %v696 = vld [vmem:[#allocation6 + $0x158] sm:$0xf]
    %v697 = vld [vmem:[#allocation6 + $0x15c] sm:$0xf]
    %v698 = vld [vmem:[#allocation6 + $0x160] sm:$0xf]
    %v699 = vld [vmem:[#allocation6 + $0x164] sm:$0xf]
    %v700 = vld [vmem:[#allocation6 + $0x168] sm:$0xf]
    %v701 = vld [vmem:[#allocation6 + $0x16c] sm:$0xf]
    %v702 = vld [vmem:[#allocation6 + $0x170] sm:$0xf]
    %v703 = vld [vmem:[#allocation6 + $0x174] sm:$0xf]
    %v704 = vld [vmem:[#allocation6 + $0x178] sm:$0xf]
    %v705 = vld [vmem:[#allocation6 + $0x17c] sm:$0xf]
    %v722 = vunpack.c.l.b16 %v690
    %v723 = vunpack.c.l.b16 %v691
    %v724 = vunpack.c.l.b16 %v692
    %v725 = vunpack.c.l.b16 %v693
    %v726 = vunpack.c.l.b16 %v694
    %v727 = vunpack.c.l.b16 %v695
    %v728 = vunpack.c.l.b16 %v696
    %v729 = vunpack.c.l.b16 %v697
    %v730 = vunpack.c.l.b16 %v698
    %v731 = vunpack.c.l.b16 %v699
    %v732 = vunpack.c.l.b16 %v700
    %v733 = vunpack.c.l.b16 %v701
    %v734 = vunpack.c.l.b16 %v702
    %v735 = vunpack.c.l.b16 %v703
    %v736 = vunpack.c.l.b16 %v704
    %v737 = vunpack.c.l.b16 %v705
    %v738 = vpack.c.b16 %v723, %v722
    %v739 = vpack.c.b16 %v725, %v724
    %v740 = vpack.c.b16 %v727, %v726
    %v741 = vpack.c.b16 %v729, %v728
    %v742 = vpack.c.b16 %v731, %v730
    %v743 = vpack.c.b16 %v733, %v732
    %v744 = vpack.c.b16 %v735, %v734
    %v745 = vpack.c.b16 %v737, %v736
    %754 = vmatprep.subr.bf16.mxu0 0
    %755 = vmatpush1.bf16.msra.mxu0 %v738
    %756 = vmatprep.subr.bf16.mxu0 0
    %757 = vmatpush1.bf16.msra.mxu0 %v739
    %758 = vmatprep.subr.bf16.mxu0 0
    %759 = vmatpush1.bf16.msra.mxu0 %v740
    %760 = vmatprep.subr.bf16.mxu0 0
    %761 = vmatpush1.bf16.msra.mxu0 %v741
    %762 = vmatprep.subr.bf16.mxu0 0
    %763 = vmatpush1.bf16.msra.mxu0 %v742
    %764 = vmatprep.subr.bf16.mxu0 0
    %765 = vmatpush1.bf16.msra.mxu0 %v743
    %766 = vmatprep.subr.bf16.mxu0 0
    %767 = vmatpush1.bf16.msra.mxu0 %v744
    %768 = vmatprep.subr.bf16.mxu0 0
    %769 = vmatpush1.bf16.msra.mxu0 %v745
    %770 = vmatprep.subr.bf16.mxu0 0
    %771 = vmatpush1.bf16.msra.mxu0 0
    %772 = vmatprep.subr.bf16.mxu0 0
    %773 = vmatpush1.bf16.msra.mxu0 0
    %774 = vmatprep.subr.bf16.mxu0 0
    %775 = vmatpush1.bf16.msra.mxu0 0
    %776 = vmatprep.subr.bf16.mxu0 0
    %777 = vmatpush1.bf16.msra.mxu0 0
    %778 = vmatprep.subr.bf16.mxu0 0
    %779 = vmatpush1.bf16.msra.mxu0 0
    %780 = vmatprep.subr.bf16.mxu0 0
    %781 = vmatpush1.bf16.msra.mxu0 0
    %782 = vmatprep.subr.bf16.mxu0 0
    %783 = vmatpush1.bf16.msra.mxu0 0
    %784 = vmatprep.subr.bf16.mxu0 0
    %785 = vmatpush1.bf16.msra.mxu0 0
    %786 = vmatprep.mubr.bf16.mxu0 0
    %787 = vmatmul.mubr.bf16.gmra.mrb[0].mxu0 %v689
    %v788 = vpop.f32.mrb[0].mxu0
    %v789 = vadd.f32 0.0, %v788
    %v790 = vpop.f32.mrb[0].mxu0
    %v791 = vpop.f32.mrb[0].mxu0
    %v792 = vpop.f32.mrb[0].mxu0
    %793 = vdwg.mxu0
    %v794 = vrot.slane %v789, 4
    %v795 = vadd.f32 %v789, %v794
    %v796 = vrot.slane %v795, 2
    %v797 = vadd.f32 %v795, %v796
    %v798 = vrot.slane %v797, 1
    %v799 = vadd.f32 %v797, %v798
    %v800 = vmul.f32 %v799, 0.125
    %v801 = vmul.f32 %v789, %v789
    %v802 = vrot.slane %v801, 4
    %v803 = vadd.f32 %v801, %v802
    %v804 = vrot.slane %v803, 2
    %v805 = vadd.f32 %v803, %v804
    %v806 = vrot.slane %v805, 1
    %v807 = vadd.f32 %v805, %v806
    %v808 = vmul.f32 %v807, 0.125
    %v809 = vmul.f32 %v800, %v800
    %v810 = vsub.f32 %v808, %v809
    %v811 = vmax.f32 %v810, 0.0
    %v812 = vadd.f32 %v811, 1e-05
    %v813 = vrsqrt.pop %v812
    %v814 = vmul.f32 %v59, %v813
    %v815 = vmul.f32 %v800, %v814
    %v817 = vrot.slane %v815, 4
    %v819 = vsub.f32 %v59, %v817
    %v820 = vlaneseq
    %v821 = vshrl.u32 %v820, 7
    %v822 = vsub.s32 3, %v821
    %v823 = vrot.slane %v814, %v822
    %v824 = vmul.f32 %v789, %v823
    %v825 = vlaneseq
    %v826 = vshrl.u32 %v825, 7
    %v827 = vsub.s32 7, %v826
    %v828 = vrot.slane %v819, %v827
    %v829 = vadd.f32 %v824, %v828
    %v830 = vmax.f32 %v829, 0.0
    %831 = vst [vmem:[#allocation10] sm:$0xff] %v830
    %v832 = vpack.c.bf16 %v830, %v830
    %v833 = vld [vmem:[#allocation6 + $0x180] sm:$0xf]
    %v834 = vld [vmem:[#allocation6 + $0x184] sm:$0xf]
    %v835 = vld [vmem:[#allocation6 + $0x188] sm:$0xf]
    %v836 = vld [vmem:[#allocation6 + $0x18c] sm:$0xf]
    %v837 = vld [vmem:[#allocation6 + $0x190] sm:$0xf]
    %v838 = vld [vmem:[#allocation6 + $0x194] sm:$0xf]
    %v839 = vld [vmem:[#allocation6 + $0x198] sm:$0xf]
    %v840 = vld [vmem:[#allocation6 + $0x19c] sm:$0xf]
    %v841 = vld [vmem:[#allocation6 + $0x1a0] sm:$0xf]
    %v842 = vld [vmem:[#allocation6 + $0x1a4] sm:$0xf]
    %v843 = vld [vmem:[#allocation6 + $0x1a8] sm:$0xf]
    %v844 = vld [vmem:[#allocation6 + $0x1ac] sm:$0xf]
    %v845 = vld [vmem:[#allocation6 + $0x1b0] sm:$0xf]
    %v846 = vld [vmem:[#allocation6 + $0x1b4] sm:$0xf]
    %v847 = vld [vmem:[#allocation6 + $0x1b8] sm:$0xf]
    %v848 = vld [vmem:[#allocation6 + $0x1bc] sm:$0xf]
    %v849 = vlaneseq
    %v850 = vshrl.u32 %v849, 7
    %v851 = vsub.s32 0, %v850
    %v852 = vrot.slane %v60, %v851
    %v869 = vunpack.c.l.b16 %v833
    %v870 = vunpack.c.l.b16 %v834
    %v871 = vunpack.c.l.b16 %v835
    %v872 = vunpack.c.l.b16 %v836
    %v873 = vunpack.c.l.b16 %v837
    %v874 = vunpack.c.l.b16 %v838
    %v875 = vunpack.c.l.b16 %v839
    %v876 = vunpack.c.l.b16 %v840
    %v877 = vunpack.c.l.b16 %v841
    %v878 = vunpack.c.l.b16 %v842
    %v879 = vunpack.c.l.b16 %v843
    %v880 = vunpack.c.l.b16 %v844
    %v881 = vunpack.c.l.b16 %v845
    %v882 = vunpack.c.l.b16 %v846
    %v883 = vunpack.c.l.b16 %v847
    %v884 = vunpack.c.l.b16 %v848
    %v885 = vpack.c.b16 %v870, %v869
    %v886 = vpack.c.b16 %v872, %v871
    %v887 = vpack.c.b16 %v874, %v873
    %v888 = vpack.c.b16 %v876, %v875
    %v889 = vpack.c.b16 %v878, %v877
    %v890 = vpack.c.b16 %v880, %v879
    %v891 = vpack.c.b16 %v882, %v881
    %v892 = vpack.c.b16 %v884, %v883
    %901 = vmatprep.subr.bf16.mxu0 0
    %902 = vmatpush1.bf16.msra.mxu0 %v885
    %903 = vmatprep.subr.bf16.mxu0 0
    %904 = vmatpush1.bf16.msra.mxu0 %v886
    %905 = vmatprep.subr.bf16.mxu0 0
    %906 = vmatpush1.bf16.msra.mxu0 %v887
    %907 = vmatprep.subr.bf16.mxu0 0
    %908 = vmatpush1.bf16.msra.mxu0 %v888
    %909 = vmatprep.subr.bf16.mxu0 0
    %910 = vmatpush1.bf16.msra.mxu0 %v889
    %911 = vmatprep.subr.bf16.mxu0 0
    %912 = vmatpush1.bf16.msra.mxu0 %v890
    %913 = vmatprep.subr.bf16.mxu0 0
    %914 = vmatpush1.bf16.msra.mxu0 %v891
    %915 = vmatprep.subr.bf16.mxu0 0
    %916 = vmatpush1.bf16.msra.mxu0 %v892
    %917 = vmatprep.subr.bf16.mxu0 0
    %918 = vmatpush1.bf16.msra.mxu0 0
    %919 = vmatprep.subr.bf16.mxu0 0
    %920 = vmatpush1.bf16.msra.mxu0 0
    %921 = vmatprep.subr.bf16.mxu0 0
    %922 = vmatpush1.bf16.msra.mxu0 0
    %923 = vmatprep.subr.bf16.mxu0 0
    %924 = vmatpush1.bf16.msra.mxu0 0
    %925 = vmatprep.subr.bf16.mxu0 0
    %926 = vmatpush1.bf16.msra.mxu0 0
    %927 = vmatprep.subr.bf16.mxu0 0
    %928 = vmatpush1.bf16.msra.mxu0 0
    %929 = vmatprep.subr.bf16.mxu0 0
    %930 = vmatpush1.bf16.msra.mxu0 0
    %931 = vmatprep.subr.bf16.mxu0 0
    %932 = vmatpush1.bf16.msra.mxu0 0
    %933 = vmatprep.mubr.bf16.mxu0 0
    %934 = vmatmul.mubr.bf16.gmra.mrb[0].mxu0 %v832
    %v935 = vpop.f32.mrb[0].mxu0
    %v936 = vadd.f32 %v852, %v935
    %v937 = vpop.f32.mrb[0].mxu0
    %v938 = vpop.f32.mrb[0].mxu0
    %v939 = vpop.f32.mrb[0].mxu0
    %940 = vdwg.mxu0
    %vm941 = vcmask 31744
    %942 = vst.msk [vmem:[%s3] sm:$0xff] %vm941, %v936
    // Predicated region
    $region26: #{dnn_net_forward.1} parent=1 // pred_check
      _
    $region27: #{dnn_net_forward.1} parent=1 // pred_check_branch
      %944 = sbr.rel (0) target = $region29
    $region28: #{dnn_net_forward.1} parent=1 // pred_region
      _
    $region29: #{dnn_net_forward.1} parent=1 // pred_fallthru
      _
    // Predicated region
    $region30: #{dnn_net_forward.1} parent=1 // pred_check
      _
    $region31: #{dnn_net_forward.1} parent=1 // pred_check_branch
      %946 = sbr.rel (0) target = $region33
    $region32: #{dnn_net_forward.1} parent=1 // pred_region
      %s948 = ssub.s32 128, 128
      %949 = vsyncadd [#allocation5], %s948
      %s951 = sshll.u32 [#allocation9], 4
      %s952 = int_to_ptr.vmem [resolvable:$true] %s951
      %954 = dma.vmem_to_hbm [thread:$0]  %s952, 128, %s4, [#allocation5]
    $region33: #{dnn_net_forward.1} parent=1 // pred_fallthru
      _
    // Predicated region
    $region34: #{dnn_net_forward.1} parent=1 // pred_check
      _
    $region35: #{dnn_net_forward.1} parent=1 // pred_check_branch
      %956 = sbr.rel (0) target = $region37
    $region36: #{dnn_net_forward.1} parent=1 // pred_region
      %s958 = ssub.s32 128, 128
      %959 = vsyncadd [#allocation11], %s958
      %s961 = sshll.u32 [#allocation10], 4
      %s962 = int_to_ptr.vmem [resolvable:$true] %s961
      %964 = dma.vmem_to_hbm [thread:$0]  %s962, 128, %s5, [#allocation11]
    $region37: #{dnn_net_forward.1} parent=1 // pred_fallthru
      _
    // Predicated region
    $region38: #{dnn_net_forward.1} parent=1 // pred_check
      _
    $region39: #{dnn_net_forward.1} parent=1 // pred_check_branch
      %966 = sbr.rel (0) target = $region41
    $region40: #{dnn_net_forward.1} parent=1 // pred_region
      _
    $region41: #{dnn_net_forward.1} parent=1 // pred_fallthru
      _
    // Predicated region
    $region42: #{dnn_net_forward.1} parent=1 // pred_check
      _
    $region43: #{dnn_net_forward.1} parent=1 // pred_check_branch
      %968 = sbr.rel (0) target = $region45
    $region44: #{dnn_net_forward.1} parent=1 // pred_region
      %969 = dma.done [#allocation5], 128
    $region45: #{dnn_net_forward.1} parent=1 // pred_fallthru
      _
    // Predicated region
    $region46: #{dnn_net_forward.1} parent=1 // pred_check
      _
    $region47: #{dnn_net_forward.1} parent=1 // pred_check_branch
      %971 = sbr.rel (0) target = $region49
    $region48: #{dnn_net_forward.1} parent=1 // pred_region
      %972 = dma.done [#allocation11], 128
    $region49: #{dnn_net_forward.1} parent=1 // pred_fallthru
      _
    %973 = vsyncpa [#allocation4], 1
    %974 = vsyncpa [#allocation7], 1
    %975 = vsyncpa [#allocation5], 1
    %976 = vsyncpa [#allocation11], 1

</llo_original>
